<compile_context>
chip_gen: v7x
topology: tpu7x:2x2x1
jax: 0.10.0
libtpu: 0.0.40
codegen_flags: <defaults>
</compile_context>

<pallas_src>
import functools
import math

import jax
import jax.numpy as jnp
from jax import lax
from jax.experimental import pallas as pl
from jax.experimental.pallas import tpu as pltpu


# ---------------------------------------------------------------------------
# Generation-aware scoped-VMEM budget (v7x has 64 MiB/TC vs 128 MiB v5e/v6e).
# ---------------------------------------------------------------------------
def _vmem_limit_bytes():
    try:
        cap = pltpu.get_tpu_info().vmem_capacity_bytes
    except Exception:
        cap = 128 * 1024 * 1024
    # ~40 MiB on v7x, 64 MiB on v5e/v6e -> headroom for compiler scratch/spill.
    return min(int(cap) * 5 // 8, 64 * 1024 * 1024)


_VMEM_LIMIT = _vmem_limit_bytes()


# ---------------------------------------------------------------------------
# Tiling helper
# ---------------------------------------------------------------------------
def _pick_tile(dim, target, aligns):
    """Largest tile <= target dividing `dim`, multiple of one of `aligns`
    (tried coarsest first for MXU fill). Falls back to the full dimension."""
    if dim <= target:
        return dim
    for a in aligns:
        t = (target // a) * a
        while t >= a:
            if dim % t == 0:
                return t
            t -= a
    return dim
    # TODO(synk): masked remainder tiles (pl.cdiv grids) instead of full-dim fallback.


# ---------------------------------------------------------------------------
# Tiled, pipelined linear kernel:  y = x @ w + b   (bf16 MXU, f32 accumulate)
# ---------------------------------------------------------------------------
def _linear_kernel(x_ref, w_ref, b_ref, o_ref, acc_ref):
    k = pl.program_id(2)

    @pl.when(k == 0)
    def _init():
        acc_ref[...] = jnp.zeros_like(acc_ref)

    acc_ref[...] += jnp.dot(
        x_ref[...].astype(jnp.bfloat16),
        w_ref[...].astype(jnp.bfloat16),
        preferred_element_type=jnp.float32,
    )

    @pl.when(k == pl.num_programs(2) - 1)
    def _finalize():
        o_ref[...] = (acc_ref[...] + b_ref[...]).astype(o_ref.dtype)


def pallas_linear(x2d, w, b, *, tm_target=512, tn_target=512, tk_target=1024):
    """x2d: (M, K) f32, w: (K, N) bf16 column layout (x @ w), b: (N,) f32 -> (M, N) f32."""
    M0, K = x2d.shape
    K2, N = w.shape
    assert K == K2

    tm = _pick_tile(M0, tm_target, (256, 128, 8))
    M = M0
    if tm == M0 and M0 > tm_target:
        # Awkward (non-divisible) large M: pad rows to a 256 multiple, slice after.
        tm = 256
        pad = (-M0) % tm
        x2d = jnp.pad(x2d, ((0, pad), (0, 0)))
        M = M0 + pad
    tn = _pick_tile(N, tn_target, (256, 128))
    tk = _pick_tile(K, tk_target, (256, 128))
    grid = (M // tm, N // tn, K // tk)

    cost = pl.CostEstimate(
        flops=2 * M * N * K,
        transcendentals=0,
        bytes_accessed=4 * M * K + 2 * K * N + 4 * N + 4 * M * N,
    )

    y = pl.pallas_call(
        _linear_kernel,
        out_shape=jax.ShapeDtypeStruct((M, N), jnp.float32),
        grid_spec=pltpu.PrefetchScalarGridSpec(
            num_scalar_prefetch=0,
            grid=grid,
            in_specs=[
                pl.BlockSpec((tm, tk), lambda i, j, k: (i, k)),
                pl.BlockSpec((tk, tn), lambda i, j, k: (k, j)),
                pl.BlockSpec((1, tn), lambda i, j, k: (0, j)),
            ],
            out_specs=pl.BlockSpec((tm, tn), lambda i, j, k: (i, j)),
            scratch_shapes=[pltpu.VMEM((tm, tn), jnp.float32)],
        ),
        compiler_params=pltpu.CompilerParams(
            dimension_semantics=("parallel", "parallel", "arbitrary"),
            vmem_limit_bytes=_VMEM_LIMIT,
        ),
        cost_estimate=cost,
    )(x2d, w, b.reshape(1, N))
    return y[:M0] if M != M0 else y


# ---------------------------------------------------------------------------
# Flash-style multi-head attention:
#   grid = (B, q_tiles, kv_tiles) -- kv axis is the (innermost, "arbitrary")
#   online-softmax reduction; heads stay packed along the lane-dense D axis.
# ---------------------------------------------------------------------------
def _flash_mha_kernel(*refs, H, Dh, has_mask):
    if has_mask:
        q_ref, k_ref, v_ref, mask_ref, o_ref, m_sc, l_sc, acc_sc = refs
    else:
        q_ref, k_ref, v_ref, o_ref, m_sc, l_sc, acc_sc = refs
        mask_ref = None

    j = pl.program_id(2)

    @pl.when(j == 0)
    def _init():
        m_sc[...] = jnp.full(m_sc.shape, -jnp.inf, jnp.float32)
        l_sc[...] = jnp.zeros(l_sc.shape, jnp.float32)
        acc_sc[...] = jnp.zeros(acc_sc.shape, jnp.float32)

    # Scale 1/sqrt(Dh) is folded into W_q at init; cast once per tile to bf16.
    q = q_ref[0].astype(jnp.bfloat16)          # (tq, D)
    k = k_ref[0].astype(jnp.bfloat16)          # (tk, D)
    v = v_ref[0].astype(jnp.bfloat16)          # (tk, D)

    if has_mask:
        # Additive bias computed ONCE per (q,kv) tile and shared across heads.
        # (Fully-masked rows degenerate to a uniform-ish softmax, same as spec.)
        bias = jnp.where(mask_ref[0].astype(jnp.float32) == 0.0,
                         jnp.float32(-1.0e9), jnp.float32(0.0))   # (tq, tk)

    # Static unroll over heads; every head's result lands in VMEM scratch
    # immediately, so (tq, tk) temporaries are live for one head only.
    # TODO(synk): for very large H, switch to lax.fori_loop with pl.ds head slices.
    for h in range(H):
        sl = slice(h * Dh, (h + 1) * Dh)
        s = lax.dot_general(
            q[:, sl], k[:, sl],
            dimension_numbers=(((1,), (1,)), ((), ())),
            preferred_element_type=jnp.float32,
        )                                                          # (tq, tk)
        if has_mask:
            s = s + bias
        m_prev = m_sc[h]                                           # (tq, 1)
        m_new = jnp.maximum(m_prev, jnp.max(s, axis=-1, keepdims=True))
        alpha = jnp.exp(m_prev - m_new)
        p = jnp.exp(s - m_new)                                     # (tq, tk)
        l_sc[h] = alpha * l_sc[h] + jnp.sum(p, axis=-1, keepdims=True)
        acc_sc[:, sl] = alpha * acc_sc[:, sl] + jnp.dot(
            p.astype(jnp.bfloat16), v[:, sl],
            preferred_element_type=jnp.float32,
        )
        m_sc[h] = m_new

    @pl.when(j == pl.num_programs(2) - 1)
    def _finalize():
        for h in range(H):
            sl = slice(h * Dh, (h + 1) * Dh)
            l_h = l_sc[h]
            r = pl.reciprocal(l_h, approx=True)
            r = r * (2.0 - l_h * r)                # one Newton step -> ~f32 accuracy
            acc_sc[:, sl] = acc_sc[:, sl] * r
        # Single lane-dense store of the full head-packed (tq, D) tile.
        o_ref[0] = acc_sc[...].astype(o_ref.dtype)


def pallas_flash_mha(q, k, v, H, Dh, mask=None, *,
                     q_blk=0, k_blk=0, v_blk=0,
                     tq_target=256, tk_target=512):
    """q/k/v: (B, S, *) head-packed; the D-wide Q/K/V slice is selected by
    q_blk/k_blk/v_blk block indices along the last axis (packed-QKV support).
    Returns (B, Sq, D) f32."""
    D = H * Dh
    B, Sq = q.shape[0], q.shape[1]
    Skv = k.shape[1]

    tq = _pick_tile(Sq, tq_target, (256, 128, 8))
    tk = _pick_tile(Skv, tk_target, (256, 128))   # 128-aligned for the mask's lane dim
    grid = (B, Sq // tq, Skv // tk)
    # TODO(synk): masked remainder kv-tiles for awkward S (falls back to full-S here).

    in_specs = [
        pl.BlockSpec((1, tq, D), lambda b, i, j, _qb=q_blk: (b, i, _qb)),
        pl.BlockSpec((1, tk, D), lambda b, i, j, _kb=k_blk: (b, j, _kb)),
        pl.BlockSpec((1, tk, D), lambda b, i, j, _vb=v_blk: (b, j, _vb)),
    ]
    args = [q, k, v]

    has_mask = mask is not None
    if has_mask:
        assert mask.shape[0] in (1, B) and mask.shape[-2:] == (Sq, Skv)
        batched = mask.shape[0] == B
        in_specs.append(
            pl.BlockSpec((1, tq, tk),
                         lambda b, i, j, _bt=batched: (b if _bt else 0, i, j)))
        args.append(mask)

    cost = pl.CostEstimate(
        flops=4 * B * Sq * Skv * D,
        transcendentals=B * H * Sq * Skv,
        bytes_accessed=4 * (2 * B * Sq * D + 2 * B * Skv * D)
        + (B * Sq * Skv if has_mask else 0),
    )

    return pl.pallas_call(
        functools.partial(_flash_mha_kernel, H=H, Dh=Dh, has_mask=has_mask),
        out_shape=jax.ShapeDtypeStruct((B, Sq, D), jnp.float32),
        grid_spec=pltpu.PrefetchScalarGridSpec(
            num_scalar_prefetch=0,
            grid=grid,
            in_specs=in_specs,
            out_specs=pl.BlockSpec((1, tq, D), lambda b, i, j: (b, i, 0)),
            scratch_shapes=[
                pltpu.VMEM((H, tq, 1), jnp.float32),   # running max per head
                pltpu.VMEM((H, tq, 1), jnp.float32),   # running sum per head
                pltpu.VMEM((tq, D), jnp.float32),      # head-packed accumulator
            ],
        ),
        compiler_params=pltpu.CompilerParams(
            # On v7x (2 TCs) pick tq so B * (Sq // tq) >= 2 for real workloads.
            dimension_semantics=("parallel", "parallel", "arbitrary"),
            vmem_limit_bytes=_VMEM_LIMIT,
        ),
        cost_estimate=cost,
    )(*args)


# ---------------------------------------------------------------------------
# Module
# ---------------------------------------------------------------------------
def _prep_mask(mask):
    """Normalize a user mask to (Bm, Sq, Skv) int8 (0 -> masked, 1 -> keep)."""
    m = jnp.asarray(mask)
    if m.ndim == 4:
        # (B, 1, S, S) style; TODO(synk): per-head (B, H, S, S) masks not plumbed.
        m = m[:, 0]
    if m.ndim == 2:
        m = m[None]
    return (m != 0).astype(jnp.int8)
    # TODO(synk): for the purely-causal case, generate the bias in-kernel with
    # lax.broadcasted_iota on absolute q/k positions instead of streaming a mask.


class MultiHeadAttentionPallas:
    """JAX/Pallas port of the PyTorch MultiHeadAttention module (forward only)."""

    def __init__(self, D, H, key):
        assert D % H == 0, "D must be divisible by H"
        self.D, self.H, self.Dh = D, H, D // H

        keys = jax.random.split(key, 8)
        bound = 1.0 / math.sqrt(D)

        def make(kw, kb):
            w = jax.random.uniform(kw, (D, D), jnp.float32, -bound, bound)
            b = jax.random.uniform(kb, (D,), jnp.float32, -bound, bound)
            return w, b

        # f32 master weights (nn.Linear layout: weight (out, in), bias (out,)).
        self.Wq, self.bq = make(keys[0], keys[1])
        self.Wk, self.bk = make(keys[2], keys[3])
        self.Wv, self.bv = make(keys[4], keys[5])
        self.Wo, self.bo = make(keys[6], keys[7])

        # Kernel weights: column layout (x @ W), bf16 for MXU peak, with the
        # attention scale 1/sqrt(Dh) folded into the Q projection (W and b).
        scale = 1.0 / math.sqrt(self.Dh)
        self.Wq_col = (self.Wq.T * scale).astype(jnp.bfloat16)
        self.bq_s = self.bq * scale
        self.Wk_col = self.Wk.T.astype(jnp.bfloat16)
        self.Wv_col = self.Wv.T.astype(jnp.bfloat16)
        self.Wo_col = self.Wo.T.astype(jnp.bfloat16)
        # Fused (scaled-Q | K | V) projection for the self-attention path.
        self.W_qkv = jnp.concatenate(
            [self.Wq.T * scale, self.Wk.T, self.Wv.T], axis=1).astype(jnp.bfloat16)
        self.b_qkv = jnp.concatenate([self.bq_s, self.bk, self.bv])

    def _linear(self, x, w_col, b):
        B, S, Din = x.shape
        y = pallas_linear(x.reshape(B * S, Din), w_col, b)
        return y.reshape(B, S, -1)

    def __call__(self, Q, K, V, mask=None):
        m = _prep_mask(mask) if mask is not None else None

        if Q is K and K is V:
            # Self-attention: one fused QKV matmul (x read once).
            qkv = self._linear(Q, self.W_qkv, self.b_qkv)           # (B, S, 3D) f32
            if self.D % 128 == 0:
                # No-split path: BlockSpec index maps pick the Q/K/V D-blocks
                # straight out of the packed array (free layout plumbing).
                out = pallas_flash_mha(qkv, qkv, qkv, self.H, self.Dh, m,
                                       q_blk=0, k_blk=1, v_blk=2)
            else:
                # D-block slicing needs D % 128 == 0; fall back to a split copy.
                q, k, v = jnp.split(qkv, 3, axis=-1)
                out = pallas_flash_mha(q, k, v, self.H, self.Dh, m)
        else:
            q = self._linear(Q, self.Wq_col, self.bq_s)
            k = self._linear(K, self.Wk_col, self.bk)
            v = self._linear(V, self.Wv_col, self.bv)
            out = pallas_flash_mha(q, k, v, self.H, self.Dh, m)

        return self._linear(out, self.Wo_col, self.bo)


# ---------------------------------------------------------------------------
# Pure-JAX f32 reference (faithful to the PyTorch spec) for correctness check.
# ---------------------------------------------------------------------------
def reference_mha(mod, Q, K, V, mask=None):
    def proj(x, w, b):
        return x @ w.T + b

    def split(x, H):
        B, S, D = x.shape
        return x.reshape(B, S, H, D // H).transpose(0, 2, 1, 3)

    q = split(proj(Q, mod.Wq, mod.bq), mod.H)
    k = split(proj(K, mod.Wk, mod.bk), mod.H)
    v = split(proj(V, mod.Wv, mod.bv), mod.H)
    scores = jnp.einsum("bhqd,bhkd->bhqk", q, k) / jnp.sqrt(jnp.float32(mod.Dh))
    if mask is not None:
        m = _prep_mask(mask)[:, None].astype(jnp.float32)           # (Bm,1,S,S)
        scores = jnp.where(m == 0.0, jnp.float32(-1.0e9), scores)
    p = jax.nn.softmax(scores, axis=-1)
    o = jnp.einsum("bhqk,bhkd->bhqd", p, v)
    B, H, S, Dh = o.shape
    o = o.transpose(0, 2, 1, 3).reshape(B, S, H * Dh)
    return proj(o, mod.Wo, mod.bo)


if __name__ == "__main__":
    tol = dict(atol=2e-2, rtol=2e-2)   # bf16 MXU operands vs f32 reference

    key = jax.random.PRNGKey(0)
    kparams, kq, kk, kv, kparams2, kx2 = jax.random.split(key, 6)

    # Small config: B=2, S=8, D=32, H=4  (Dh=8 -> split fallback path).
    B, S, D, H = 2, 8, 32, 4
    mha = MultiHeadAttentionPallas(D, H, kparams)
    X = jax.random.normal(kq, (B, S, D), jnp.float32)
    Kx = jax.random.normal(kk, (B, S, D), jnp.float32)
    Vx = jax.random.normal(kv, (B, S, D), jnp.float32)

    # 1) Self-attention (fused QKV projection), no mask.
    out_self = jax.block_until_ready(mha(X, X, X))
    ref_self = reference_mha(mha, X, X, X)
    assert out_self.shape == (B, S, D)
    assert jnp.allclose(out_self, ref_self, **tol), "self-attention mismatch"

    # 2) Cross-attention (separate projections), no mask.
    out_cross = jax.block_until_ready(mha(X, Kx, Vx))
    ref_cross = reference_mha(mha, X, Kx, Vx)
    assert jnp.allclose(out_cross, ref_cross, **tol), "cross-attention mismatch"

    # 3) Self-attention with a causal mask (mask==0 -> -1e9, matching the spec).
    causal = jnp.tril(jnp.ones((S, S), jnp.float32))
    out_mask = jax.block_until_ready(mha(X, X, X, mask=causal))
    ref_mask = reference_mha(mha, X, X, X, mask=causal)
    assert jnp.allclose(out_mask, ref_mask, **tol), "masked attention mismatch"

    # 4) D=128 config exercises the packed no-split QKV path (D % 128 == 0).
    B2, S2, D2, H2 = 1, 8, 128, 4
    mha2 = MultiHeadAttentionPallas(D2, H2, kparams2)
    X2 = jax.random.normal(kx2, (B2, S2, D2), jnp.float32)
    causal2 = jnp.tril(jnp.ones((S2, S2), jnp.float32))
    out2 = jax.block_until_ready(mha2(X2, X2, X2, mask=causal2))
    ref2 = reference_mha(mha2, X2, X2, X2, mask=causal2)
    assert jnp.allclose(out2, ref2, **tol), "packed-QKV path mismatch"

    print("KERNEL_OK")
</pallas_src>

<mosaic_0001>
module attributes {stable_mosaic.version = 11 : i64} {
  func.func @_linear_kernel(%arg0: i32, %arg1: i32, %arg2: i32, %arg3: memref<16x32xf32, #tpu.memory_space<vmem>>, %arg4: memref<32x96xbf16, #tpu.memory_space<vmem>>, %arg5: memref<1x96xf32, #tpu.memory_space<vmem>>, %arg6: memref<16x96xf32, #tpu.memory_space<vmem>>, %arg7: memref<16x96xf32, #tpu.memory_space<vmem>>) attributes {dimension_semantics = [#tpu.dimension_semantics<parallel>, #tpu.dimension_semantics<parallel>, #tpu.dimension_semantics<arbitrary>], iteration_bounds = array<i64: 1, 1, 1>, scalar_prefetch = 0 : i64, scratch_operands = 1 : i64, tpu.core_type = #tpu.core_type<tc>, window_params = [{transform_indices = @transform_0, window_bounds = array<i64: 16, 32>}, {transform_indices = @transform_1, window_bounds = array<i64: 32, 96>}, {transform_indices = @transform_2, window_bounds = array<i64: 1, 96>}, {transform_indices = @transform_3, window_bounds = array<i64: 16, 96>}]} {
    %c0_i32 = arith.constant 0 : i32
    %0 = arith.cmpi eq, %arg2, %c0_i32 : i32
    %1 = arith.extui %0 : i1 to i32
    %c0_i32_0 = arith.constant 0 : i32
    %2 = arith.cmpi ne, %1, %c0_i32_0 : i32
    scf.if %2 {
      %cst_10 = arith.constant 0.000000e+00 : f32
      %13 = vector.broadcast %cst_10 : f32 to vector<16x96xf32>
      %c0_11 = arith.constant 0 : index
      %c0_12 = arith.constant 0 : index
      %14 = vector.load %arg7[%c0_11, %c0_12] : memref<16x96xf32, #tpu.memory_space<vmem>>, vector<16x96xf32>
      tpu.vector_store %arg7[%c0_11, %c0_12], %13 {strides = array<i32>} : memref<16x96xf32, #tpu.memory_space<vmem>>, vector<16x96xf32>,
    } else {
    }
    %c0 = arith.constant 0 : index
    %c0_1 = arith.constant 0 : index
    %3 = vector.load %arg7[%c0, %c0_1] : memref<16x96xf32, #tpu.memory_space<vmem>>, vector<16x96xf32>
    %c0_2 = arith.constant 0 : index
    %c0_3 = arith.constant 0 : index
    %4 = vector.load %arg3[%c0_2, %c0_3] : memref<16x32xf32, #tpu.memory_space<vmem>>, vector<16x32xf32>
    %5 = arith.truncf %4 : vector<16x32xf32> to vector<16x32xbf16>
    %c0_4 = arith.constant 0 : index
    %c0_5 = arith.constant 0 : index
    %6 = vector.load %arg4[%c0_4, %c0_5] : memref<32x96xbf16, #tpu.memory_space<vmem>>, vector<32x96xbf16>
    %cst = arith.constant dense<0.000000e+00> : vector<16x96xf32>
    %7 = tpu.matmul %5, %6, %cst {dimension_numbers = #tpu.dot_dimension_numbers<[1], [0], [0], [1], [0, 0, 1, 1], [], []>} : vector<16x32xbf16>, vector<32x96xbf16>, vector<16x96xf32> -> vector<16x96xf32>
    %8 = arith.addf %3, %7 : vector<16x96xf32>
    %c0_6 = arith.constant 0 : index
    %c0_7 = arith.constant 0 : index
    %9 = vector.load %arg7[%c0_6, %c0_7] : memref<16x96xf32, #tpu.memory_space<vmem>>, vector<16x96xf32>
    tpu.vector_store %arg7[%c0_6, %c0_7], %8 {strides = array<i32>} : memref<16x96xf32, #tpu.memory_space<vmem>>, vector<16x96xf32>,
    %c0_i32_8 = arith.constant 0 : i32
    %10 = arith.cmpi eq, %arg2, %c0_i32_8 : i32
    %11 = arith.extui %10 : i1 to i32
    %c0_i32_9 = arith.constant 0 : i32
    %12 = arith.cmpi ne, %11, %c0_i32_9 : i32
    scf.if %12 {
      %c0_10 = arith.constant 0 : index
      %c0_11 = arith.constant 0 : index
      %13 = vector.load %arg7[%c0_10, %c0_11] : memref<16x96xf32, #tpu.memory_space<vmem>>, vector<16x96xf32>
      %c0_12 = arith.constant 0 : index
      %c0_13 = arith.constant 0 : index
      %14 = vector.load %arg5[%c0_12, %c0_13] : memref<1x96xf32, #tpu.memory_space<vmem>>, vector<1x96xf32>
      %15 = vector.broadcast %14 : vector<1x96xf32> to vector<16x96xf32>
      %16 = arith.addf %13, %15 : vector<16x96xf32>
      %c0_14 = arith.constant 0 : index
      %c0_15 = arith.constant 0 : index
      %17 = vector.load %arg6[%c0_14, %c0_15] : memref<16x96xf32, #tpu.memory_space<vmem>>, vector<16x96xf32>
      tpu.vector_store %arg6[%c0_14, %c0_15], %16 {strides = array<i32>} : memref<16x96xf32, #tpu.memory_space<vmem>>, vector<16x96xf32>,
    } else {
    }
    return
  }
  func.func @transform_0(%arg0: i32, %arg1: i32, %arg2: i32) -> (i32, i32) {
    %c0_i32 = arith.constant 0 : i32
    return %arg0, %arg2 : i32, i32
  }
  func.func @transform_1(%arg0: i32, %arg1: i32, %arg2: i32) -> (i32, i32) {
    %c0_i32 = arith.constant 0 : i32
    return %arg2, %arg1 : i32, i32
  }
  func.func @transform_2(%arg0: i32, %arg1: i32, %arg2: i32) -> (i32, i32) {
    %c0_i32 = arith.constant 0 : i32
    %c0_i32_0 = arith.constant 0 : i32
    return %c0_i32, %arg1 : i32, i32
  }
  func.func @transform_3(%arg0: i32, %arg1: i32, %arg2: i32) -> (i32, i32) {
    %c0_i32 = arith.constant 0 : i32
    return %arg0, %arg1 : i32, i32
  }
}

</mosaic_0001>

<llo_original>
// kernel: tpu_custom_call.1
$region0: #{tpu_custom_call.1}
  #allocation0 [shape = 'u32[]', space=smem, size = 0x4, offset = 0x4, fixed_abs, tag = 'smem constant byte address 0x4 - core index']
  #allocation1 [shape = 'u32[144,128]{1,0:T(1,128)}', space=vmem, size = 0x12000, scoped, tag = 'internal scratch']
  #allocation2 [shape = 'f32[16,96]{1,0:T(8,128)}', space=vmem, size = 0x2000, scoped, tag = 'scratch operand']
  %s0 = inlined_call_operand.hbm [shape: f32[16,32], index: 0, kind: input, shape index: {}]
  %s1 = inlined_call_operand.hbm [shape: bf16[32,96], index: 1, kind: input, shape index: {}]
  %s2 = inlined_call_operand.hbm [shape: f32[1,96], index: 2, kind: input, shape index: {}]
  %s3 = inlined_call_operand.hbm [shape: f32[16,96], index: 3, kind: output, shape index: {}]
  %s4 = sld [smem:[#allocation0]]
  $region42: #{tpu_custom_call.1} parent=0
    _
  %s6 = ssub.s32 1, %s4
  %s7 = scalar_select 0, %s6, %s4
  $region1: #{tpu_custom_call.1} parent=0
    #allocation3 [shape = 'u8[8192]{0}', space=vmem, size = 0x2000, scoped, tag = 'input window, operand 0, single buffered']
    #allocation4 [shape = 's32[1]{0}', space=sflag, size = 0x4, scoped, tag = 'scoped memory for tpu_custom_call.1']
    #allocation5 [shape = 's32[1]{0}', space=sflag, size = 0x4, scoped, tag = 'scoped memory for tpu_custom_call.1']
    #allocation6 [shape = 'u8[8192]{0}', space=vmem, size = 0x2000, scoped, tag = 'input window, operand 1, single buffered']
    #allocation7 [shape = 's32[1]{0}', space=sflag, size = 0x4, scoped, tag = 'scoped memory for tpu_custom_call.1']
    #allocation8 [shape = 'u8[512]{0}', space=vmem, size = 0x400, scoped, tag = 'input window, operand 2, single buffered']
    #allocation9 [shape = 'u8[8192]{0}', space=vmem, size = 0x2000, scoped, tag = 'output window, operand 0, single buffered']
    %8 = vsyncpa [#allocation4], 0
    %9 = vsyncpa [#allocation7], 0
    %10 = vsyncpa [#allocation5], 0
    // Predicated region
    $region2: #{tpu_custom_call.1} parent=1 // pred_check
      _
    $region3: #{tpu_custom_call.1} parent=1 // pred_check_branch
      %12 = sbr.rel (0) target = $region5
    $region4: #{tpu_custom_call.1} parent=1 // pred_region
      %s14 = ssub.s32 256, 256
      %15 = vsyncadd [#allocation4], %s14
      %s16 = sshll.u32 [#allocation3], 4
      %s17 = int_to_ptr.vmem [resolvable:$true] %s16
      %22 = dma.hbm_to_vmem [thread:$0]  %s0, 256, %s17, [#allocation4], 128, 128, 8
    $region5: #{tpu_custom_call.1} parent=1 // pred_fallthru
      _
    // Predicated region
    $region6: #{tpu_custom_call.1} parent=1 // pred_check
      _
    $region7: #{tpu_custom_call.1} parent=1 // pred_check_branch
      %24 = sbr.rel (0) target = $region9
    $region8: #{tpu_custom_call.1} parent=1 // pred_region
      %s26 = ssub.s32 256, 256
      %27 = vsyncadd [#allocation7], %s26
      %s28 = sshll.u32 [#allocation6], 4
      %s29 = int_to_ptr.vmem [resolvable:$true] %s28
      %34 = dma.hbm_to_vmem [thread:$0]  %s1, 256, %s29, [#allocation7], 64, 64, 4
    $region9: #{tpu_custom_call.1} parent=1 // pred_fallthru
      _
    // Predicated region
    $region10: #{tpu_custom_call.1} parent=1 // pred_check
      _
    $region11: #{tpu_custom_call.1} parent=1 // pred_check_branch
      %36 = sbr.rel (0) target = $region13
    $region12: #{tpu_custom_call.1} parent=1 // pred_region
      %s38 = ssub.s32 16, 16
      %39 = vsyncadd [#allocation7], %s38
      %s41 = sshll.u32 [#allocation8], 4
      %s42 = int_to_ptr.vmem [resolvable:$true] %s41
      %44 = dma.hbm_to_vmem [thread:$0]  %s2, 16, %s42, [#allocation7]
    $region13: #{tpu_custom_call.1} parent=1 // pred_fallthru
      _
    // Predicated region
    $region14: #{tpu_custom_call.1} parent=1 // pred_check
      _
    $region15: #{tpu_custom_call.1} parent=1 // pred_check_branch
      %46 = sbr.rel (0) target = $region17
    $region16: #{tpu_custom_call.1} parent=1 // pred_region
      %47 = dma.done [#allocation4], 256
    $region17: #{tpu_custom_call.1} parent=1 // pred_fallthru
      _
    // Predicated region
    $region18: #{tpu_custom_call.1} parent=1 // pred_check
      _
    $region19: #{tpu_custom_call.1} parent=1 // pred_check_branch
      %49 = sbr.rel (0) target = $region21
    $region20: #{tpu_custom_call.1} parent=1 // pred_region
      %50 = dma.done [#allocation7], 256
    $region21: #{tpu_custom_call.1} parent=1 // pred_fallthru
      _
    // Predicated region
    $region22: #{tpu_custom_call.1} parent=1 // pred_check
      _
    $region23: #{tpu_custom_call.1} parent=1 // pred_check_branch
      %52 = sbr.rel (0) target = $region25
    $region24: #{tpu_custom_call.1} parent=1 // pred_region
      %53 = dma.done [#allocation7], 16
    $region25: #{tpu_custom_call.1} parent=1 // pred_fallthru
      _
    %p55 = scmp.eq.s32.totalorder 0, 0
    // Predicated region
    $region26: #{tpu_custom_call.1} parent=1 // pred_check
      %p56 = pneg %p55
    $region27: #{tpu_custom_call.1} parent=1 // pred_check_branch
      %58 = sbr.rel (%p56) target = $region29
    $region28: #{tpu_custom_call.1} parent=1 // pred_region
      %vm59 = vcmask 785408
      %60 = vst.msk [vmem:[#allocation2] sm:$0xff] %vm59, 0.0
      %61 = vst.msk [vmem:[#allocation2 + $0x8] sm:$0xff] %vm59, 0.0
    $region29: #{tpu_custom_call.1} parent=1 // pred_fallthru
      _
    %v62 = vld [vmem:[#allocation2] sm:$0xff]
    %v63 = vld [vmem:[#allocation2 + $0x8] sm:$0xff]
    %v64 = vld [vmem:[#allocation3] sm:$0xff]
    %v65 = vld [vmem:[#allocation3 + $0x8] sm:$0xff]
    %v66 = vpack.c.bf16 %v65, %v64
    %v67 = vld [vmem:[#allocation6] sm:$0xf]
    %v68 = vld [vmem:[#allocation6 + $0x4] sm:$0xf]
    %v69 = vld [vmem:[#allocation6 + $0x8] sm:$0xf]
    %v70 = vld [vmem:[#allocation6 + $0xc] sm:$0xf]
    %v75 = vunpack.c.l.b16 %v67
    %v76 = vunpack.c.l.b16 %v68
    %v77 = vunpack.c.l.b16 %v69
    %v78 = vunpack.c.l.b16 %v70
    %v79 = vpack.c.b16 %v76, %v75
    %v80 = vpack.c.b16 %v78, %v77
    %vm83 = vcmask 261120
    %v85 = vsel %vm83, %v66, 0
    %87 = vmatprep.subr.bf16.mxu0 0
    %88 = vmatpush1.bf16.msra.mxu0 %v79
    %89 = vmatprep.subr.bf16.mxu0 0
    %90 = vmatpush1.bf16.msra.mxu0 %v80
    %91 = vmatprep.subr.bf16.mxu0 0
    %92 = vmatpush1.bf16.msra.mxu0 0
    %93 = vmatprep.subr.bf16.mxu0 0
    %94 = vmatpush1.bf16.msra.mxu0 0
    %95 = vmatprep.subr.bf16.mxu0 0
    %96 = vmatpush1.bf16.msra.mxu0 0
    %97 = vmatprep.subr.bf16.mxu0 0
    %98 = vmatpush1.bf16.msra.mxu0 0
    %99 = vmatprep.subr.bf16.mxu0 0
    %100 = vmatpush1.bf16.msra.mxu0 0
    %101 = vmatprep.subr.bf16.mxu0 0
    %102 = vmatpush1.bf16.msra.mxu0 0
    %103 = vmatprep.subr.bf16.mxu0 0
    %104 = vmatpush1.bf16.msra.mxu0 0
    %105 = vmatprep.subr.bf16.mxu0 0
    %106 = vmatpush1.bf16.msra.mxu0 0
    %107 = vmatprep.subr.bf16.mxu0 0
    %108 = vmatpush1.bf16.msra.mxu0 0
    %109 = vmatprep.subr.bf16.mxu0 0
    %110 = vmatpush1.bf16.msra.mxu0 0
    %111 = vmatprep.subr.bf16.mxu0 0
    %112 = vmatpush1.bf16.msra.mxu0 0
    %113 = vmatprep.subr.bf16.mxu0 0
    %114 = vmatpush1.bf16.msra.mxu0 0
    %115 = vmatprep.subr.bf16.mxu0 0
    %116 = vmatpush1.bf16.msra.mxu0 0
    %117 = vmatprep.subr.bf16.mxu0 0
    %118 = vmatpush1.bf16.msra.mxu0 0
    %119 = vmatprep.mubr.bf16.mxu0 0
    %120 = vmatmul.mubr.bf16.gmra.mrb[0].mxu0 %v85
    %v121 = vpop.f32.mrb[0].mxu0
    %v122 = vadd.f32 0.0, %v121
    %v123 = vpop.f32.mrb[0].mxu0
    %v124 = vpop.f32.mrb[0].mxu0
    %v125 = vadd.f32 0.0, %v124
    %v126 = vpop.f32.mrb[0].mxu0
    %127 = vdwg.mxu0
    %v128 = vadd.f32 %v62, %v122
    %v129 = vadd.f32 %v63, %v125
    %vm130 = vcmask 785408
    %131 = vst.msk [vmem:[#allocation2] sm:$0xff] %vm130, %v128
    %132 = vst.msk [vmem:[#allocation2 + $0x8] sm:$0xff] %vm130, %v129
    // Predicated region
    $region30: #{tpu_custom_call.1} parent=1 // pred_check
      %p133 = pneg %p55
    $region31: #{tpu_custom_call.1} parent=1 // pred_check_branch
      %135 = sbr.rel (%p133) target = $region33
    $region32: #{tpu_custom_call.1} parent=1 // pred_region
      %v136 = vld [vmem:[#allocation2] sm:$0xff]
      %v137 = vld [vmem:[#allocation2 + $0x8] sm:$0xff]
      %v138 = vld [vmem:[#allocation8] sm:$0x1]
      %v140 = vlaneseq
      %v141 = vshrl.u32 %v140, 7
      %v142 = vsub.s32 0, %v141
      %v143 = vrot.slane %v138, %v142
      %v145 = vadd.f32 %v136, %v143
      %v146 = vadd.f32 %v137, %v143
      %147 = vst.msk [vmem:[#allocation9] sm:$0xff] %vm130, %v145
      %148 = vst.msk [vmem:[#allocation9 + $0x8] sm:$0xff] %vm130, %v146
    $region33: #{tpu_custom_call.1} parent=1 // pred_fallthru
      _
    // Predicated region
    $region34: #{tpu_custom_call.1} parent=1 // pred_check
      _
    $region35: #{tpu_custom_call.1} parent=1 // pred_check_branch
      %150 = sbr.rel (0) target = $region37
    $region36: #{tpu_custom_call.1} parent=1 // pred_region
      %s152 = ssub.s32 256, 256
      %153 = vsyncadd [#allocation5], %s152
      %s154 = sshll.u32 [#allocation9], 4
      %s155 = int_to_ptr.vmem [resolvable:$true] %s154
      %160 = dma.vmem_to_hbm [thread:$0]  %s155, 256, %s3, [#allocation5], 128, 128, 8
    $region37: #{tpu_custom_call.1} parent=1 // pred_fallthru
      _
    // Predicated region
    $region38: #{tpu_custom_call.1} parent=1 // pred_check
      _
    $region39: #{tpu_custom_call.1} parent=1 // pred_check_branch
      %162 = sbr.rel (0) target = $region41
    $region40: #{tpu_custom_call.1} parent=1 // pred_region
      %163 = dma.done [#allocation5], 256
    $region41: #{tpu_custom_call.1} parent=1 // pred_fallthru
      _
    %164 = vsyncpa [#allocation4], 1
    %165 = vsyncpa [#allocation7], 1
    %166 = vsyncpa [#allocation5], 1

</llo_original>
